<compile_context>
chip_gen: v7x
topology: tpu7x:2x2x1
jax: 0.10.0
libtpu: 0.0.40
codegen_flags: <defaults>
</compile_context>

<pallas_src>
import jax
import jax.numpy as jnp
from jax.experimental import pallas as pl
from jax.experimental.pallas import tpu as pltpu


def _cls_head_kernel(x_ref, w_ref, b_ref, o_ref):
    # tanh (EUP) -> matmul (MXU, f32 accumulate) -> bias add (VPU).
    # No dtype casts: bf16 inputs stay bf16 into the MXU; garbage rows of a
    # partial last batch tile are masked on store and never escape.
    x = jnp.tanh(x_ref[...])
    out = jnp.dot(x, w_ref[...], preferred_element_type=jnp.float32)
    o_ref[...] = (out + b_ref[...]).astype(o_ref.dtype)  # b is (1, Lp), broadcasts


def _round_up(n, m):
    return (n + m - 1) // m * m


def simple_cls_head(x, weight_t, bias, *, block_b=None):
    """x: (B, 2H); weight_t: (2H, L); bias: (L,). Returns (B, L) in x.dtype."""
    B, D = x.shape
    D_w, L = weight_t.shape
    assert D == D_w and bias.shape == (L,)
    out_dtype = x.dtype

    x_item = jnp.dtype(x.dtype).itemsize
    w_item = jnp.dtype(weight_t.dtype).itemsize
    b_item = jnp.dtype(bias.dtype).itemsize
    o_item = jnp.dtype(out_dtype).itemsize

    # Lane-dense output: pad the label dim to a multiple of 128. Only the tiny
    # weight/bias are padded; x is streamed unpadded.
    Lp = _round_up(max(L, 128), 128)

    # ---- batch tile sizing (generation-aware, VMEM-budget driven) ----------
    if block_b is None:
        # Budget for the double-buffered x tile + double-buffered output tile.
        # 12 MiB keeps total VMEM use (incl. resident weight) inside v5e's
        # 16 MiB default scoped VMEM and far below v7x's 64 MiB physical VMEM,
        # while still letting small-D shapes use thousands of rows per tile.
        budget = 12 * 1024 * 1024
        per_row = 2 * D * x_item + 2 * Lp * o_item
        tb = budget // max(per_row, 1)
        block_b = int(min(4096, max(8, (tb // 8) * 8)))

    if B <= 8:
        TB = B  # single full-extent block (exempt from the 8-row rule)
    else:
        TB = min(block_b, _round_up(B, 8))
        # >=2 batch tiles when possible so the "parallel" axis can shard across
        # both TensorCores on v7x (no-op on single-TC v5e/v6e).
        if B >= 16:
            TB = min(TB, _round_up((B + 1) // 2, 8))
        TB = _round_up(max(TB, 8), 8)

    grid = (pl.cdiv(B, TB),)

    # ---- pad only weight / bias on the label dim ---------------------------
    if Lp != L:
        weight_t = jnp.pad(weight_t, ((0, 0), (0, Lp - L)))
        bias = jnp.pad(bias, (0, Lp - L))
    bias2d = bias.reshape(1, Lp)

    # ---- VMEM limit sized from the actual tile footprint -------------------
    need = (
        2 * TB * D * x_item       # double-buffered x tile
        + 2 * D * Lp * w_item     # weight (constant index map; assume 2 bufs)
        + 2 * Lp * b_item         # bias
        + 2 * TB * Lp * o_item    # double-buffered output tile
    )
    vmem_limit = int(min(56 * 2**20, max(32 * 2**20, need + need // 2)))

    cost = pl.CostEstimate(
        flops=2 * B * D * Lp,
        transcendentals=B * D,
        bytes_accessed=B * D * x_item + D * Lp * w_item + Lp * b_item
        + B * Lp * o_item,
    )

    out = pl.pallas_call(
        _cls_head_kernel,
        out_shape=jax.ShapeDtypeStruct((B, Lp), out_dtype),
        grid_spec=pltpu.PrefetchScalarGridSpec(
            num_scalar_prefetch=0,
            grid=grid,
            in_specs=[
                # Batch-tiled x: double-buffered, last tile may be partial
                # (masked stores on the output side keep it correct).
                pl.BlockSpec((TB, D), lambda i: (i, 0)),
                # Weight / bias: constant block index -> resident in VMEM.
                pl.BlockSpec((D, Lp), lambda i: (0, 0)),
                pl.BlockSpec((1, Lp), lambda i: (0, 0)),
            ],
            out_specs=pl.BlockSpec((TB, Lp), lambda i: (i, 0)),
        ),
        compiler_params=pltpu.CompilerParams(
            # Independent batch tiles: shard across both TensorCores on v7x.
            dimension_semantics=("parallel",),
            vmem_limit_bytes=vmem_limit,
        ),
        cost_estimate=cost,
    )(x, weight_t, bias2d)

    return out[:, :L]


def init_params(key, hidden_size, num_labels):
    """Deterministic init matching nn.Linear shapes: W (L, 2H), b (L,)."""
    in_features = hidden_size * 2
    kw, kb = jax.random.split(key)
    bound = 1.0 / jnp.sqrt(in_features)
    weight = jax.random.uniform(kw, (num_labels, in_features),
                                jnp.float32, -bound, bound)
    bias = jax.random.uniform(kb, (num_labels,), jnp.float32, -bound, bound)
    return weight, bias


if __name__ == "__main__":
    # TODO(synk): dropout arg of SimpleClsHead is never applied in forward(),
    # so there is nothing to translate for it.

    # Small shapes consistent with the module.
    hidden_size = 32
    num_labels = 4
    batch = 2

    key = jax.random.PRNGKey(0)
    kx, kp = jax.random.split(key)
    x = jax.random.normal(kx, (batch, hidden_size * 2), dtype=jnp.float32)
    weight, bias = init_params(kp, hidden_size, num_labels)

    out = jax.block_until_ready(simple_cls_head(x, weight.T, bias))
    ref = jnp.tanh(x) @ weight.T + bias
    assert out.shape == (batch, num_labels)
    assert jnp.allclose(out, ref, atol=1e-5, rtol=1e-5)

    # Multi-tile batch grid with an UNPADDED partial last tile:
    # 300 rows, block_b=128 -> 3 tiles, last tile has 44 valid rows.
    hidden_size2, num_labels2, batch2 = 128, 4, 300
    k2x, k2p = jax.random.split(jax.random.PRNGKey(1))
    x2 = jax.random.normal(k2x, (batch2, hidden_size2 * 2), dtype=jnp.float32)
    w2, b2 = init_params(k2p, hidden_size2, num_labels2)
    out2 = jax.block_until_ready(simple_cls_head(x2, w2.T, b2, block_b=128))
    ref2 = jnp.tanh(x2) @ w2.T + b2
    assert out2.shape == (batch2, num_labels2)
    assert jnp.allclose(out2, ref2, atol=1e-5, rtol=1e-5)

    # bf16 end-to-end path (halves HBM traffic on x; loose tolerance vs f32).
    x3 = jax.random.normal(jax.random.PRNGKey(2), (16, 128), dtype=jnp.float32)
    w3, b3 = init_params(jax.random.PRNGKey(3), 64, 4)
    out3 = jax.block_until_ready(
        simple_cls_head(x3.astype(jnp.bfloat16),
                        w3.T.astype(jnp.bfloat16),
                        b3.astype(jnp.bfloat16)))
    ref3 = jnp.tanh(x3) @ w3.T + b3
    assert out3.shape == (16, 4) and out3.dtype == jnp.bfloat16
    assert jnp.allclose(out3.astype(jnp.float32), ref3, atol=5e-2, rtol=5e-2)

    print("KERNEL_OK")
</pallas_src>

<mosaic_0001>
module attributes {stable_mosaic.version = 11 : i64} {
  func.func @_cls_head_kernel(%arg0: i32, %arg1: memref<2x64xf32, #tpu.memory_space<vmem>>, %arg2: memref<64x128xf32, #tpu.memory_space<vmem>>, %arg3: memref<1x128xf32, #tpu.memory_space<vmem>>, %arg4: memref<2x128xf32, #tpu.memory_space<vmem>>) attributes {dimension_semantics = [#tpu.dimension_semantics<parallel>], iteration_bounds = array<i64: 1>, scalar_prefetch = 0 : i64, scratch_operands = 0 : i64, tpu.core_type = #tpu.core_type<tc>, window_params = [{transform_indices = @transform_0, window_bounds = array<i64: 2, 64>}, {pipeline_mode = #tpu.pipeline_mode<synchronous>, transform_indices = @transform_1, window_bounds = array<i64: 64, 128>}, {pipeline_mode = #tpu.pipeline_mode<synchronous>, transform_indices = @transform_2, window_bounds = array<i64: 1, 128>}, {transform_indices = @transform_3, window_bounds = array<i64: 2, 128>}]} {
    %c0 = arith.constant 0 : index
    %c0_0 = arith.constant 0 : index
    %0 = vector.load %arg1[%c0, %c0_0] : memref<2x64xf32, #tpu.memory_space<vmem>>, vector<2x64xf32>
    %1 = math.tanh %0 : vector<2x64xf32>
    %c0_1 = arith.constant 0 : index
    %c0_2 = arith.constant 0 : index
    %2 = vector.load %arg2[%c0_1, %c0_2] : memref<64x128xf32, #tpu.memory_space<vmem>>, vector<64x128xf32>
    %cst = arith.constant dense<0.000000e+00> : vector<2x128xf32>
    %3 = tpu.matmul %1, %2, %cst {dimension_numbers = #tpu.dot_dimension_numbers<[1], [0], [0], [1], [0, 0, 1, 1], [], []>} : vector<2x64xf32>, vector<64x128xf32>, vector<2x128xf32> -> vector<2x128xf32>
    %c0_3 = arith.constant 0 : index
    %c0_4 = arith.constant 0 : index
    %4 = vector.load %arg3[%c0_3, %c0_4] : memref<1x128xf32, #tpu.memory_space<vmem>>, vector<1x128xf32>
    %5 = vector.broadcast %4 : vector<1x128xf32> to vector<2x128xf32>
    %6 = arith.addf %3, %5 : vector<2x128xf32>
    %c0_5 = arith.constant 0 : index
    %c0_6 = arith.constant 0 : index
    %7 = vector.load %arg4[%c0_5, %c0_6] : memref<2x128xf32, #tpu.memory_space<vmem>>, vector<2x128xf32>
    tpu.vector_store %arg4[%c0_5, %c0_6], %6 {strides = array<i32>} : memref<2x128xf32, #tpu.memory_space<vmem>>, vector<2x128xf32>,
    return
  }
  func.func @transform_0(%arg0: i32) -> (i32, i32) {
    %c0_i32 = arith.constant 0 : i32
    %c0_i32_0 = arith.constant 0 : i32
    return %arg0, %c0_i32 : i32, i32
  }
  func.func @transform_1(%arg0: i32) -> (i32, i32) {
    %c0_i32 = arith.constant 0 : i32
    %c0_i32_0 = arith.constant 0 : i32
    %c0_i32_1 = arith.constant 0 : i32
    return %c0_i32, %c0_i32_0 : i32, i32
  }
  func.func @transform_2(%arg0: i32) -> (i32, i32) {
    %c0_i32 = arith.constant 0 : i32
    %c0_i32_0 = arith.constant 0 : i32
    %c0_i32_1 = arith.constant 0 : i32
    return %c0_i32, %c0_i32_0 : i32, i32
  }
  func.func @transform_3(%arg0: i32) -> (i32, i32) {
    %c0_i32 = arith.constant 0 : i32
    %c0_i32_0 = arith.constant 0 : i32
    return %arg0, %c0_i32 : i32, i32
  }
}

</mosaic_0001>

<llo_original>
// kernel: tpu_custom_call.1
$region0: #{tpu_custom_call.1}
  #allocation0 [shape = 'u32[]', space=smem, size = 0x4, offset = 0x4, fixed_abs, tag = 'smem constant byte address 0x4 - core index']
  #allocation1 [shape = 'u32[144,128]{1,0:T(1,128)}', space=vmem, size = 0x12000, scoped, tag = 'internal scratch']
  %s0 = inlined_call_operand.hbm [shape: f32[2,64], index: 0, kind: input, shape index: {}]
  %s1 = inlined_call_operand.hbm [shape: f32[64,128], index: 1, kind: input, shape index: {}]
  %s2 = inlined_call_operand.vmem [shape: f32[1,128], index: 2, kind: input, shape index: {}]
  %s3 = inlined_call_operand.hbm [shape: f32[2,128], index: 3, kind: output, shape index: {}]
  %s4 = sld [smem:[#allocation0]]
  $region30: #{tpu_custom_call.1} parent=0
    _
  %s6 = ssub.s32 1, %s4
  %s7 = scalar_select 0, %s6, %s4
  $region1: #{tpu_custom_call.1} parent=0
    #allocation2 [shape = 'u8[1024]{0}', space=vmem, size = 0x400, scoped, tag = 'input window, operand 0, single buffered']
    #allocation3 [shape = 's32[1]{0}', space=sflag, size = 0x4, scoped, tag = 'scoped memory for tpu_custom_call.1']
    #allocation4 [shape = 's32[1]{0}', space=sflag, size = 0x4, scoped, tag = 'scoped memory for tpu_custom_call.1']
    #allocation5 [shape = 'u8[32768]{0}', space=vmem, size = 0x8000, scoped, tag = 'input window, operand 1, single buffered']
    #allocation6 [shape = 's32[1]{0}', space=sflag, size = 0x4, scoped, tag = 'scoped memory for tpu_custom_call.1']
    #allocation7 [shape = 'u8[1024]{0}', space=vmem, size = 0x400, scoped, tag = 'output window, operand 0, single buffered']
    %8 = vsyncpa [#allocation3], 0
    %9 = vsyncpa [#allocation6], 0
    %10 = vsyncpa [#allocation4], 0
    // Predicated region
    $region2: #{tpu_custom_call.1} parent=1 // pred_check
      _
    $region3: #{tpu_custom_call.1} parent=1 // pred_check_branch
      %12 = sbr.rel (0) target = $region5
    $region4: #{tpu_custom_call.1} parent=1 // pred_region
      %s14 = ssub.s32 32, 32
      %15 = vsyncadd [#allocation3], %s14
      %s17 = sshll.u32 [#allocation2], 4
      %s18 = int_to_ptr.vmem [resolvable:$true] %s17
      %20 = dma.hbm_to_vmem [thread:$0]  %s0, 32, %s18, [#allocation3]
    $region5: #{tpu_custom_call.1} parent=1 // pred_fallthru
      _
    // Predicated region
    $region6: #{tpu_custom_call.1} parent=1 // pred_check
      _
    $region7: #{tpu_custom_call.1} parent=1 // pred_check_branch
      %22 = sbr.rel (0) target = $region9
    $region8: #{tpu_custom_call.1} parent=1 // pred_region
      %s24 = ssub.s32 1024, 1024
      %25 = vsyncadd [#allocation6], %s24
      %s26 = sshll.u32 [#allocation5], 4
      %s27 = int_to_ptr.vmem [resolvable:$true] %s26
      %32 = dma.hbm_to_vmem [thread:$0]  %s1, 1024, %s27, [#allocation6], 128, 128, 8
    $region9: #{tpu_custom_call.1} parent=1 // pred_fallthru
      _
    // Predicated region
    $region10: #{tpu_custom_call.1} parent=1 // pred_check
      _
    $region11: #{tpu_custom_call.1} parent=1 // pred_check_branch
      %34 = sbr.rel (0) target = $region13
    $region12: #{tpu_custom_call.1} parent=1 // pred_region
      _
    $region13: #{tpu_custom_call.1} parent=1 // pred_fallthru
      _
    // Predicated region
    $region14: #{tpu_custom_call.1} parent=1 // pred_check
      _
    $region15: #{tpu_custom_call.1} parent=1 // pred_check_branch
      %36 = sbr.rel (0) target = $region17
    $region16: #{tpu_custom_call.1} parent=1 // pred_region
      %37 = dma.done [#allocation3], 32
    $region17: #{tpu_custom_call.1} parent=1 // pred_fallthru
      _
    // Predicated region
    $region18: #{tpu_custom_call.1} parent=1 // pred_check
      _
    $region19: #{tpu_custom_call.1} parent=1 // pred_check_branch
      %39 = sbr.rel (0) target = $region21
    $region20: #{tpu_custom_call.1} parent=1 // pred_region
      %40 = dma.done [#allocation6], 1024
    $region21: #{tpu_custom_call.1} parent=1 // pred_fallthru
      _
    %v41 = vld [vmem:[#allocation2] sm:$0x3]
    %v42 = vtanh.pop %v41
    %v43 = vld [vmem:[#allocation5] sm:$0xff]
    %v44 = vld [vmem:[#allocation5 + $0x8] sm:$0xff]
    %v45 = vld [vmem:[#allocation5 + $0x10] sm:$0xff]
    %v46 = vld [vmem:[#allocation5 + $0x18] sm:$0xff]
    %v47 = vld [vmem:[#allocation5 + $0x20] sm:$0xff]
    %v48 = vld [vmem:[#allocation5 + $0x28] sm:$0xff]
    %v49 = vld [vmem:[#allocation5 + $0x30] sm:$0xff]
    %v50 = vld [vmem:[#allocation5 + $0x38] sm:$0xff]
    %v51 = vld [vmem:[%s2] sm:$0x1]
    %v53 = vlaneseq
    %v54 = vshrl.u32 %v53, 7
    %v55 = vsub.s32 0, %v54
    %v56 = vrot.slane %v51, %v55
    %vm58 = vcmask 523264
    %v60 = vsel %vm58, %v42, 0
    %62 = vmatprep.subr.mxu0 0.0
    %63 = vmatpush1.msra.mxu0 %v43
    %64 = vmatprep.subr.mxu0 0.0
    %65 = vmatpush1.msra.mxu0 %v44
    %66 = vmatprep.subr.mxu0 0.0
    %67 = vmatpush1.msra.mxu0 %v45
    %68 = vmatprep.subr.mxu0 0.0
    %69 = vmatpush1.msra.mxu0 %v46
    %70 = vmatprep.subr.mxu0 0.0
    %71 = vmatpush1.msra.mxu0 %v47
    %72 = vmatprep.subr.mxu0 0.0
    %73 = vmatpush1.msra.mxu0 %v48
    %74 = vmatprep.subr.mxu0 0.0
    %75 = vmatpush1.msra.mxu0 %v49
    %76 = vmatprep.subr.mxu0 0.0
    %77 = vmatpush1.msra.mxu0 %v50
    %78 = vmatprep.subr.mxu0 0.0
    %79 = vmatpush1.msra.mxu0 0.0
    %80 = vmatprep.subr.mxu0 0.0
    %81 = vmatpush1.msra.mxu0 0.0
    %82 = vmatprep.subr.mxu0 0.0
    %83 = vmatpush1.msra.mxu0 0.0
    %84 = vmatprep.subr.mxu0 0.0
    %85 = vmatpush1.msra.mxu0 0.0
    %86 = vmatprep.subr.mxu0 0.0
    %87 = vmatpush1.msra.mxu0 0.0
    %88 = vmatprep.subr.mxu0 0.0
    %89 = vmatpush1.msra.mxu0 0.0
    %90 = vmatprep.subr.mxu0 0.0
    %91 = vmatpush1.msra.mxu0 0.0
    %92 = vmatprep.subr.mxu0 0.0
    %93 = vmatpush1.msra.mxu0 0.0
    %94 = vmatprep.subr.mxu0 0.0
    %95 = vmatpush1.msra.mxu0 0.0
    %96 = vmatprep.subr.mxu0 0.0
    %97 = vmatpush1.msra.mxu0 0.0
    %98 = vmatprep.subr.mxu0 0.0
    %99 = vmatpush1.msra.mxu0 0.0
    %100 = vmatprep.subr.mxu0 0.0
    %101 = vmatpush1.msra.mxu0 0.0
    %102 = vmatprep.subr.mxu0 0.0
    %103 = vmatpush1.msra.mxu0 0.0
    %104 = vmatprep.subr.mxu0 0.0
    %105 = vmatpush1.msra.mxu0 0.0
    %106 = vmatprep.subr.mxu0 0.0
    %107 = vmatpush1.msra.mxu0 0.0
    %108 = vmatprep.subr.mxu0 0.0
    %109 = vmatpush1.msra.mxu0 0.0
    %110 = vmatprep.subr.mxu0 0.0
    %111 = vmatpush1.msra.mxu0 0.0
    %112 = vmatprep.subr.mxu0 0.0
    %113 = vmatpush1.msra.mxu0 0.0
    %114 = vmatprep.subr.mxu0 0.0
    %115 = vmatpush1.msra.mxu0 0.0
    %116 = vmatprep.subr.mxu0 0.0
    %117 = vmatpush1.msra.mxu0 0.0
    %118 = vmatprep.subr.mxu0 0.0
    %119 = vmatpush1.msra.mxu0 0.0
    %120 = vmatprep.subr.mxu0 0.0
    %121 = vmatpush1.msra.mxu0 0.0
    %122 = vmatprep.subr.mxu0 0.0
    %123 = vmatpush1.msra.mxu0 0.0
    %124 = vmatprep.subr.mxu0 0.0
    %125 = vmatpush1.msra.mxu0 0.0
    %126 = vmatprep.mubr.f32.mxu0 0.0
    %127 = vmatmul.mubr.f32.gmra.mrb[0].mxu0 %v60
    %v128 = vpop.f32.mrb[0].mxu0
    %v129 = vadd.f32 %v56, %v128
    %v130 = vpop.f32.mrb[0].mxu0
    %131 = vdwg.mxu0
    %132 = vst [vmem:[#allocation7] sm:$0x3] %v129
    // Predicated region
    $region22: #{tpu_custom_call.1} parent=1 // pred_check
      _
    $region23: #{tpu_custom_call.1} parent=1 // pred_check_branch
      %134 = sbr.rel (0) target = $region25
    $region24: #{tpu_custom_call.1} parent=1 // pred_region
      %s136 = ssub.s32 32, 32
      %137 = vsyncadd [#allocation4], %s136
      %s139 = sshll.u32 [#allocation7], 4
      %s140 = int_to_ptr.vmem [resolvable:$true] %s139
      %142 = dma.vmem_to_hbm [thread:$0]  %s140, 32, %s3, [#allocation4]
    $region25: #{tpu_custom_call.1} parent=1 // pred_fallthru
      _
    // Predicated region
    $region26: #{tpu_custom_call.1} parent=1 // pred_check
      _
    $region27: #{tpu_custom_call.1} parent=1 // pred_check_branch
      %144 = sbr.rel (0) target = $region29
    $region28: #{tpu_custom_call.1} parent=1 // pred_region
      %145 = dma.done [#allocation4], 32
    $region29: #{tpu_custom_call.1} parent=1 // pred_fallthru
      _
    %146 = vsyncpa [#allocation3], 1
    %147 = vsyncpa [#allocation6], 1
    %148 = vsyncpa [#allocation4], 1

</llo_original>
